<compile_context>
chip_gen: v5e
topology: v5e:2x2
jax: 0.10.0
libtpu: 0.0.40
codegen_flags: <defaults>
</compile_context>

<pallas_src>
import functools

import jax
import jax.numpy as jnp
from jax import lax
from jax.experimental import pallas as pl
from jax.experimental.pallas import tpu as pltpu

_LANE = 128
_SUBLANE = 8
# Per-input-block budget in elements: 1M elems = 4 MiB at f32 (2 MiB at bf16).
# 2 inputs x 2 pipeline buffers + <=2 accumulators stays well under the vmem
# limit requested below.
_MAX_BLOCK_ELEMS = 1 << 20
_VMEM_LIMIT = 48 * 1024 * 1024


def _round_up(x, m):
    return -(-x // m) * m


def _cdiv(a, b):
    return -(-a // b)


def _masked_rmse_kernel(o_ref, t_ref, ssq_ref, *rest, use_mask, nodata,
                        rows_total, cols_total, rows_blk, hwb, acc_rows,
                        col_tail, row_tail):
    """Accumulate masked sum((o-t)^2) (and valid count) per row-block.

    o_ref/t_ref : (rows_blk, hwb) dense 2-D blocks.
    ssq_ref[/cnt_ref] : (1, 1) f32 SMEM partials (one per row-block i),
        written once at the last column step of that i.
    ssq_acc[/cnt_acc] : (acc_rows, hwb) f32 VMEM accumulators, re-initialized
        at column step 0 of every i (so the i axis can be 'parallel').
    """
    if use_mask:
        cnt_ref, ssq_acc, cnt_acc = rest
    else:
        (ssq_acc,) = rest
        cnt_ref = cnt_acc = None

    i = pl.program_id(0)
    j = pl.program_id(1)

    @pl.when(j == 0)
    def _init():
        ssq_acc[...] = jnp.zeros_like(ssq_acc)
        if use_mask:
            cnt_acc[...] = jnp.zeros_like(cnt_acc)

    o = o_ref[...].astype(jnp.float32)
    t_nat = t_ref[...]                       # native dtype (nodata compare)
    diff = o - t_nat.astype(jnp.float32)

    def _fold(x):
        # Fold the block's row dim down to acc_rows sublanes with vreg-wise
        # (VPU) adds only — no cross-sublane XLU work in the hot loop.
        if acc_rows != rows_blk:
            return x.reshape(rows_blk // acc_rows, acc_rows, hwb).sum(axis=0)
        return x

    def _accum(tail):
        valid = None
        if use_mask:
            valid = t_nat != jnp.asarray(nodata, dtype=t_nat.dtype)
        if tail and col_tail:
            col = j * hwb + lax.broadcasted_iota(jnp.int32, o.shape, 1)
            ok = col < cols_total
            valid = ok if valid is None else jnp.logical_and(valid, ok)
        if tail and row_tail:
            row = i * rows_blk + lax.broadcasted_iota(jnp.int32, o.shape, 0)
            ok = row < rows_total
            valid = ok if valid is None else jnp.logical_and(valid, ok)
        d = diff if valid is None else jnp.where(valid, diff, jnp.float32(0.0))
        ssq_acc[...] += _fold(d * d)
        if use_mask:
            cnt_acc[...] += _fold(valid.astype(jnp.float32))

    if col_tail or row_tail:
        conds = []
        if col_tail:
            conds.append(j == pl.num_programs(1) - 1)
        if row_tail:
            conds.append(i == pl.num_programs(0) - 1)
        tail_cond = conds[0]
        for c in conds[1:]:
            tail_cond = jnp.logical_or(tail_cond, c)

        @pl.when(tail_cond)
        def _tail():
            _accum(True)

        @pl.when(jnp.logical_not(tail_cond))
        def _interior():
            _accum(False)
    else:
        _accum(False)

    @pl.when(j == pl.num_programs(1) - 1)
    def _finalize():
        ssq_ref[0, 0] = jnp.sum(ssq_acc[...])
        if use_mask:
            cnt_ref[0, 0] = jnp.sum(cnt_acc[...])


def _pick_hwb(hw, cols_o, cols_t, need_divide):
    """Pick a lane-block width. Returns (hwb, col_tail_needed)."""
    cap = max(_LANE, (_MAX_BLOCK_ELEMS // _SUBLANE) // _LANE * _LANE)
    if need_divide:
        # hw % 128 == 0 guaranteed by caller: largest lane-aligned divisor.
        d = hw // _LANE
        for k in range(min(d, cap // _LANE), 0, -1):
            if d % k == 0:
                return _LANE * k, False
    # Full-extent block along hw (legal if lane-aligned or equal to both
    # views' last dims).
    if hw <= cap and (hw % _LANE == 0 or (cols_o == hw and cols_t == hw)):
        return hw, False
    if hw % _LANE == 0:
        # Largest lane-aligned divisor that is still a reasonably big block.
        d = hw // _LANE
        for k in range(cap // _LANE, 0, -1):
            if d % k == 0 and _LANE * k >= min(cap, hw) // 2:
                return _LANE * k, False
    hwb = min(cap, _round_up(hw, _LANE))
    return hwb, (hw % hwb) != 0


def _pick_rows(rows, hwb):
    budget_rows = max(1, _MAX_BLOCK_ELEMS // hwb)
    if rows <= budget_rows:
        return rows, False                       # full dim: always legal
    rows_blk = max(_SUBLANE, (budget_rows // _SUBLANE) * _SUBLANE)
    return rows_blk, (rows % rows_blk) != 0


def masked_rmse_loss(output, target, *, mask: bool, nodata: int):
    """JAX/Pallas equivalent of MaskedRMSELoss(mask, nodata).forward(output, target)."""
    N, C, H, W = output.shape
    Nt, Ct, Ht, Wt = target.shape
    assert (Nt, Ht, Wt) == (N, H, W)
    assert Ct in (1, C)
    HW = H * W

    bcast = False
    if mask:
        assert Ct == 1, "mask=True requires a single-channel target"
        # Channel 0 is selected purely through the BlockSpec: the (N, C*HW)
        # view is only iterated over its first HW columns (no wrapper copy).
        o_view = output.reshape(N, C * HW)
        t_view = target.reshape(N, HW)
        rows, cols_o, cols_t = N, C * HW, HW
    elif Ct == C:
        # Dense case: fold (N, C) into the sublane axis for full VPU packing.
        o_view = output.reshape(N * C, HW)
        t_view = target.reshape(N * C, HW)
        rows, cols_o, cols_t = N * C, HW, HW
    else:
        # Channel broadcast (Ct == 1 < C).
        if HW % _LANE == 0:
            # Dense 2-D blocks for both; the broadcast is realized through the
            # target's modular column index_map (requires hwb | HW).
            o_view = output.reshape(N, C * HW)
            t_view = target.reshape(N, HW)
            rows, cols_o, cols_t = N, C * HW, HW
            bcast = True
        else:
            # TODO(synk): rare non-lane-aligned HW — materialize the broadcast
            # instead of adding a sublane-padded 3-D path.
            o_view = output.reshape(N * C, HW)
            t_view = jnp.broadcast_to(target.reshape(N, 1, HW),
                                      (N, C, HW)).reshape(N * C, HW)
            rows, cols_o, cols_t = N * C, HW, HW

    hwb, col_tail = _pick_hwb(HW, cols_o, cols_t, need_divide=bcast)
    rows_blk, row_tail = _pick_rows(rows, hwb)
    acc_rows = _SUBLANE if rows_blk % _SUBLANE == 0 else rows_blk

    n_hw = (HW // hwb) if bcast else _cdiv(HW, hwb)
    n_col = C * n_hw if bcast else n_hw
    n_row = _cdiv(rows, rows_blk)
    grid = (n_row, n_col)

    if bcast:
        t_index_map = lambda i, j: (i, j % n_hw)
    else:
        t_index_map = lambda i, j: (i, j)

    kernel = functools.partial(
        _masked_rmse_kernel,
        use_mask=mask, nodata=float(nodata),
        rows_total=rows, cols_total=(C * HW if bcast else HW),
        rows_blk=rows_blk, hwb=hwb, acc_rows=acc_rows,
        col_tail=col_tail, row_tail=row_tail)

    part_shape = jax.ShapeDtypeStruct((n_row, 1), jnp.float32)
    out_spec = pl.BlockSpec((1, 1), lambda i, j: (i, 0),
                            memory_space=pltpu.SMEM)
    scratch = [pltpu.VMEM((acc_rows, hwb), jnp.float32)]
    if mask:
        out_shape = (part_shape, part_shape)
        out_specs = (out_spec, out_spec)
        scratch.append(pltpu.VMEM((acc_rows, hwb), jnp.float32))
    else:
        out_shape = part_shape
        out_specs = out_spec

    res = pl.pallas_call(
        kernel,
        out_shape=out_shape,
        grid_spec=pltpu.PrefetchScalarGridSpec(
            num_scalar_prefetch=0,
            grid=grid,
            in_specs=[pl.BlockSpec((rows_blk, hwb), lambda i, j: (i, j)),
                      pl.BlockSpec((rows_blk, hwb), t_index_map)],
            out_specs=out_specs,
            scratch_shapes=scratch),
        compiler_params=pltpu.CompilerParams(
            dimension_semantics=("parallel", "arbitrary"),
            vmem_limit_bytes=_VMEM_LIMIT),
    )(o_view, t_view)

    if mask:
        ssq_part, cnt_part = res
        total = jnp.sum(cnt_part)
    else:
        ssq_part = res
        total = jnp.float32(N * C * HW)
    # NaN if every element is masked out, matching torch.mean of an empty set.
    return jnp.sqrt(jnp.sum(ssq_part) / total)


def _reference(output, target, *, mask: bool, nodata: int):
    output = output.astype(jnp.float32)
    target = target.astype(jnp.float32)
    if mask:
        m = target != nodata
        o = output[:, 0:1, :, :]
        diff = jnp.where(m, o - target, 0.0)
        return jnp.sqrt(jnp.sum(diff * diff) / jnp.sum(m))
    diff = output - target  # broadcast
    return jnp.sqrt(jnp.mean(diff * diff))


if __name__ == "__main__":
    key = jax.random.PRNGKey(0)
    k1, k2, k3, k4, k5, k6 = jax.random.split(key, 6)

    N, C, H, W = 2, 4, 16, 16
    NODATA = -1

    output = jax.random.normal(k1, (N, C, H, W), dtype=jnp.float32)
    target1 = jax.random.normal(k2, (N, 1, H, W), dtype=jnp.float32)
    hole = jax.random.bernoulli(k3, 0.25, (N, 1, H, W))
    target1 = jnp.where(hole, jnp.float32(NODATA), target1)

    # 1) mask=True: masked footprint RMSE, channel 0 selected via BlockSpec.
    got = masked_rmse_loss(output, target1, mask=True, nodata=NODATA)
    jax.block_until_ready(got)
    want = _reference(output, target1, mask=True, nodata=NODATA)
    assert jnp.allclose(got, want, rtol=1e-5, atol=1e-5), (got, want)

    # 2) mask=False, single-channel target broadcast across C via index_map.
    got = masked_rmse_loss(output, target1, mask=False, nodata=NODATA)
    jax.block_until_ready(got)
    want = _reference(output, target1, mask=False, nodata=NODATA)
    assert jnp.allclose(got, want, rtol=1e-5, atol=1e-5), (got, want)

    # 3) mask=False, full-channel target (dense 2-D path + sublane fold).
    out3 = jax.random.normal(k4, (16, C, H, W), dtype=jnp.float32)
    tgt3 = jax.random.normal(k5, (16, C, H, W), dtype=jnp.float32)
    got = masked_rmse_loss(out3, tgt3, mask=False, nodata=NODATA)
    jax.block_until_ready(got)
    want = _reference(out3, tgt3, mask=False, nodata=NODATA)
    assert jnp.allclose(got, want, rtol=1e-5, atol=1e-5), (got, want)

    # 4) mask=True with a non-lane-aligned spatial extent (ragged column tail).
    out4 = jax.random.normal(k6, (N, C, 15, 20), dtype=jnp.float32)
    tgt4 = jax.random.normal(k2, (N, 1, 15, 20), dtype=jnp.float32)
    hole4 = jax.random.bernoulli(k3, 0.25, (N, 1, 15, 20))
    tgt4 = jnp.where(hole4, jnp.float32(NODATA), tgt4)
    got = masked_rmse_loss(out4, tgt4, mask=True, nodata=NODATA)
    jax.block_until_ready(got)
    want = _reference(out4, tgt4, mask=True, nodata=NODATA)
    assert jnp.allclose(got, want, rtol=1e-5, atol=1e-5), (got, want)

    print("KERNEL_OK")
</pallas_src>

<mosaic_0001>
module attributes {stable_mosaic.version = 11 : i64} {
  func.func @_masked_rmse_kernel(%arg0: i32, %arg1: i32, %arg2: memref<2x256xf32, #tpu.memory_space<vmem>>, %arg3: memref<2x256xf32, #tpu.memory_space<vmem>>, %arg4: memref<1x1xf32, #tpu.memory_space<smem>>, %arg5: memref<1x1xf32, #tpu.memory_space<smem>>, %arg6: memref<2x256xf32, #tpu.memory_space<vmem>>, %arg7: memref<2x256xf32, #tpu.memory_space<vmem>>) attributes {dimension_semantics = [#tpu.dimension_semantics<parallel>, #tpu.dimension_semantics<arbitrary>], iteration_bounds = array<i64: 1, 1>, scalar_prefetch = 0 : i64, scratch_operands = 2 : i64, tpu.core_type = #tpu.core_type<tc>, window_params = [{transform_indices = @transform_0, window_bounds = array<i64: 2, 256>}, {transform_indices = @transform_1, window_bounds = array<i64: 2, 256>}, {transform_indices = @transform_2, window_bounds = array<i64: 1, 1>}, {transform_indices = @transform_3, window_bounds = array<i64: 1, 1>}]} {
    %c0_i32 = arith.constant 0 : i32
    %0 = arith.cmpi eq, %arg1, %c0_i32 : i32
    %1 = arith.extui %0 : i1 to i32
    %c0_i32_0 = arith.constant 0 : i32
    %2 = arith.cmpi ne, %1, %c0_i32_0 : i32
    scf.if %2 {
      %cst_15 = arith.constant 0.000000e+00 : f32
      %22 = vector.broadcast %cst_15 : f32 to vector<2x256xf32>
      %c0_16 = arith.constant 0 : index
      %c0_17 = arith.constant 0 : index
      %23 = vector.load %arg6[%c0_16, %c0_17] : memref<2x256xf32, #tpu.memory_space<vmem>>, vector<2x256xf32>
      tpu.vector_store %arg6[%c0_16, %c0_17], %22 {strides = array<i32>} : memref<2x256xf32, #tpu.memory_space<vmem>>, vector<2x256xf32>,
      %cst_18 = arith.constant 0.000000e+00 : f32
      %24 = vector.broadcast %cst_18 : f32 to vector<2x256xf32>
      %c0_19 = arith.constant 0 : index
      %c0_20 = arith.constant 0 : index
      %25 = vector.load %arg7[%c0_19, %c0_20] : memref<2x256xf32, #tpu.memory_space<vmem>>, vector<2x256xf32>
      tpu.vector_store %arg7[%c0_19, %c0_20], %24 {strides = array<i32>} : memref<2x256xf32, #tpu.memory_space<vmem>>, vector<2x256xf32>,
    } else {
    }
    %c0 = arith.constant 0 : index
    %c0_1 = arith.constant 0 : index
    %3 = vector.load %arg2[%c0, %c0_1] : memref<2x256xf32, #tpu.memory_space<vmem>>, vector<2x256xf32>
    %c0_2 = arith.constant 0 : index
    %c0_3 = arith.constant 0 : index
    %4 = vector.load %arg3[%c0_2, %c0_3] : memref<2x256xf32, #tpu.memory_space<vmem>>, vector<2x256xf32>
    %5 = arith.subf %3, %4 : vector<2x256xf32>
    %cst = arith.constant -1.000000e+00 : f32
    %6 = vector.broadcast %cst : f32 to vector<2x256xf32>
    %7 = arith.cmpf one, %4, %6 : vector<2x256xf32>
    %cst_4 = arith.constant 0.000000e+00 : f32
    %8 = vector.broadcast %cst_4 : f32 to vector<2x256xf32>
    %9 = arith.select %7, %5, %8 : vector<2x256xi1>, vector<2x256xf32>
    %c0_5 = arith.constant 0 : index
    %c0_6 = arith.constant 0 : index
    %10 = vector.load %arg6[%c0_5, %c0_6] : memref<2x256xf32, #tpu.memory_space<vmem>>, vector<2x256xf32>
    %11 = arith.mulf %9, %9 : vector<2x256xf32>
    %12 = arith.addf %10, %11 : vector<2x256xf32>
    %c0_7 = arith.constant 0 : index
    %c0_8 = arith.constant 0 : index
    %13 = vector.load %arg6[%c0_7, %c0_8] : memref<2x256xf32, #tpu.memory_space<vmem>>, vector<2x256xf32>
    tpu.vector_store %arg6[%c0_7, %c0_8], %12 {strides = array<i32>} : memref<2x256xf32, #tpu.memory_space<vmem>>, vector<2x256xf32>,
    %c0_9 = arith.constant 0 : index
    %c0_10 = arith.constant 0 : index
    %14 = vector.load %arg7[%c0_9, %c0_10] : memref<2x256xf32, #tpu.memory_space<vmem>>, vector<2x256xf32>
    %15 = arith.extui %7 : vector<2x256xi1> to vector<2x256xi32>
    %16 = arith.sitofp %15 : vector<2x256xi32> to vector<2x256xf32>
    %17 = arith.addf %14, %16 : vector<2x256xf32>
    %c0_11 = arith.constant 0 : index
    %c0_12 = arith.constant 0 : index
    %18 = vector.load %arg7[%c0_11, %c0_12] : memref<2x256xf32, #tpu.memory_space<vmem>>, vector<2x256xf32>
    tpu.vector_store %arg7[%c0_11, %c0_12], %17 {strides = array<i32>} : memref<2x256xf32, #tpu.memory_space<vmem>>, vector<2x256xf32>,
    %c0_i32_13 = arith.constant 0 : i32
    %19 = arith.cmpi eq, %arg1, %c0_i32_13 : i32
    %20 = arith.extui %19 : i1 to i32
    %c0_i32_14 = arith.constant 0 : i32
    %21 = arith.cmpi ne, %20, %c0_i32_14 : i32
    scf.if %21 {
      %c0_15 = arith.constant 0 : index
      %c0_16 = arith.constant 0 : index
      %22 = vector.load %arg6[%c0_15, %c0_16] : memref<2x256xf32, #tpu.memory_space<vmem>>, vector<2x256xf32>
      %23 = vector.shape_cast %22 : vector<2x256xf32> to vector<1x2x256xf32>
      %cst_17 = arith.constant dense<0.000000e+00> : vector<1xf32>
      %24 = vector.multi_reduction <add>, %23, %cst_17 [1, 2] : vector<1x2x256xf32> to vector<1xf32>
      %25 = vector.shape_cast %24 : vector<1xf32> to vector<1x1x1xf32>
      %26 = vector.extract %25[0, 0, 0] : f32 from vector<1x1x1xf32>
      %c0_18 = arith.constant 0 : index
      %c0_19 = arith.constant 0 : index
      %27 = memref.load %arg4[%c0_18, %c0_19] : memref<1x1xf32, #tpu.memory_space<smem>>
      memref.store %26, %arg4[%c0_18, %c0_19] : memref<1x1xf32, #tpu.memory_space<smem>>
      %c0_20 = arith.constant 0 : index
      %c0_21 = arith.constant 0 : index
      %28 = vector.load %arg7[%c0_20, %c0_21] : memref<2x256xf32, #tpu.memory_space<vmem>>, vector<2x256xf32>
      %29 = vector.shape_cast %28 : vector<2x256xf32> to vector<1x2x256xf32>
      %cst_22 = arith.constant dense<0.000000e+00> : vector<1xf32>
      %30 = vector.multi_reduction <add>, %29, %cst_22 [1, 2] : vector<1x2x256xf32> to vector<1xf32>
      %31 = vector.shape_cast %30 : vector<1xf32> to vector<1x1x1xf32>
      %32 = vector.extract %31[0, 0, 0] : f32 from vector<1x1x1xf32>
      %c0_23 = arith.constant 0 : index
      %c0_24 = arith.constant 0 : index
      %33 = memref.load %arg5[%c0_23, %c0_24] : memref<1x1xf32, #tpu.memory_space<smem>>
      memref.store %32, %arg5[%c0_23, %c0_24] : memref<1x1xf32, #tpu.memory_space<smem>>
    } else {
    }
    return
  }
  func.func @transform_0(%arg0: i32, %arg1: i32) -> (i32, i32) {
    %c0_i32 = arith.constant 0 : i32
    return %arg0, %arg1 : i32, i32
  }
  func.func @transform_1(%arg0: i32, %arg1: i32) -> (i32, i32) {
    %c0_i32 = arith.constant 0 : i32
    return %arg0, %arg1 : i32, i32
  }
  func.func @transform_2(%arg0: i32, %arg1: i32) -> (i32, i32) {
    %c0_i32 = arith.constant 0 : i32
    %c0_i32_0 = arith.constant 0 : i32
    return %arg0, %c0_i32 : i32, i32
  }
  func.func @transform_3(%arg0: i32, %arg1: i32) -> (i32, i32) {
    %c0_i32 = arith.constant 0 : i32
    %c0_i32_0 = arith.constant 0 : i32
    return %arg0, %c0_i32 : i32, i32
  }
}

</mosaic_0001>

<llo_original>
// kernel: tpu_custom_call.1
$region0: #{tpu_custom_call.1}
  #allocation0 [shape = 'u32[]', space=smem, size = 0x4, offset = 0x4, fixed_abs, tag = 'smem constant byte address 0x4 - core index']
  #allocation1 [shape = 'u32[72,128]{1,0:T(1,128)}', space=vmem, size = 0x9000, scoped, tag = 'internal scratch']
  #allocation2 [shape = 'f32[2,256]{1,0:T(2,128)}', space=vmem, size = 0x800, scoped, tag = 'scratch operand']
  #allocation3 [shape = 'f32[2,256]{1,0:T(2,128)}', space=vmem, size = 0x800, scoped, tag = 'scratch operand']
  %s0 = inlined_call_operand.hbm [shape: f32[2,1024], index: 0, kind: input, shape index: {}]
  %s1 = inlined_call_operand.hbm [shape: f32[2,256], index: 1, kind: input, shape index: {}]
  %s2 = inlined_call_operand.hbm [shape: f32[1,1], index: 2, kind: output, shape index: {0}]
  %s3 = inlined_call_operand.hbm [shape: f32[1,1], index: 3, kind: output, shape index: {1}]
  %4 = xla_tuple %s2, %s3
  %s5 = sld [smem:[#allocation0]]
  $region42: #{tpu_custom_call.1} parent=0
    _
  %s7 = ssub.s32 1, %s5
  %s8 = scalar_select 0, %s7, %s5
  $region1: #{tpu_custom_call.1} parent=0
    #allocation4 [shape = 'u8[2048]{0}', space=vmem, size = 0x800, scoped, tag = 'input window, operand 0, single buffered']
    #allocation5 [shape = 's32[1]{0}', space=sflag, size = 0x4, scoped, tag = 'scoped memory for tpu_custom_call.1']
    #allocation6 [shape = 's32[1]{0}', space=sflag, size = 0x4, scoped, tag = 'scoped memory for tpu_custom_call.1']
    #allocation7 [shape = 'u8[2048]{0}', space=vmem, size = 0x800, scoped, tag = 'input window, operand 1, single buffered']
    #allocation8 [shape = 's32[1]{0}', space=sflag, size = 0x4, scoped, tag = 'scoped memory for tpu_custom_call.1']
    #allocation9 [shape = 'u8[512]{0}', space=smem, size = 0x200, scoped, tag = 'output window, operand 0, single buffered']
    #allocation10 [shape = 'u8[512]{0}', space=smem, size = 0x200, scoped, tag = 'output window, operand 1, single buffered']
    #allocation11 [shape = 's32[1]{0}', space=sflag, size = 0x4, scoped, tag = 'scoped memory for tpu_custom_call.1']
    %9 = vsyncpa [#allocation5], 0
    %10 = vsyncpa [#allocation8], 0
    %11 = vsyncpa [#allocation6], 0
    %12 = vsyncpa [#allocation11], 0
    // Predicated region
    $region2: #{tpu_custom_call.1} parent=1 // pred_check
      _
    $region3: #{tpu_custom_call.1} parent=1 // pred_check_branch
      %14 = sbr.rel (0) target = $region5
    $region4: #{tpu_custom_call.1} parent=1 // pred_region
      %16 = vsyncadd [#allocation5], 0
      %s18 = sshll.u32 %s0, 4
      %s19 = int_to_ptr.hbm [resolvable:$true] %s18
      %s20 = sshll.u32 [#allocation4], 4
      %s21 = int_to_ptr.vmem [resolvable:$true] %s20
      %23 = dma.hbm_to_vmem [thread:$0]  %s19, 64, %s21, [#allocation5]
    $region5: #{tpu_custom_call.1} parent=1 // pred_fallthru
      _
    // Predicated region
    $region6: #{tpu_custom_call.1} parent=1 // pred_check
      _
    $region7: #{tpu_custom_call.1} parent=1 // pred_check_branch
      %25 = sbr.rel (0) target = $region9
    $region8: #{tpu_custom_call.1} parent=1 // pred_region
      %27 = vsyncadd [#allocation8], 0
      %s29 = sshll.u32 %s1, 4
      %s30 = int_to_ptr.hbm [resolvable:$true] %s29
      %s31 = sshll.u32 [#allocation7], 4
      %s32 = int_to_ptr.vmem [resolvable:$true] %s31
      %34 = dma.hbm_to_vmem [thread:$0]  %s30, 64, %s32, [#allocation8]
    $region9: #{tpu_custom_call.1} parent=1 // pred_fallthru
      _
    // Predicated region
    $region10: #{tpu_custom_call.1} parent=1 // pred_check
      _
    $region11: #{tpu_custom_call.1} parent=1 // pred_check_branch
      %36 = sbr.rel (0) target = $region13
    $region12: #{tpu_custom_call.1} parent=1 // pred_region
      %38 = dma.done [#allocation5], 64
    $region13: #{tpu_custom_call.1} parent=1 // pred_fallthru
      _
    // Predicated region
    $region14: #{tpu_custom_call.1} parent=1 // pred_check
      _
    $region15: #{tpu_custom_call.1} parent=1 // pred_check_branch
      %40 = sbr.rel (0) target = $region17
    $region16: #{tpu_custom_call.1} parent=1 // pred_region
      %42 = dma.done [#allocation8], 64
    $region17: #{tpu_custom_call.1} parent=1 // pred_fallthru
      _
    %p43 = scmp.eq.s32.totalorder 0, 0
    // Predicated region
    $region18: #{tpu_custom_call.1} parent=1 // pred_check
      %p44 = pneg %p43
    $region19: #{tpu_custom_call.1} parent=1 // pred_check_branch
      %46 = sbr.rel (%p44) target = $region21
    $region20: #{tpu_custom_call.1} parent=1 // pred_region
      %47 = vst [vmem:[#allocation2] sm:$0xf] 0.0
      %48 = vst [vmem:[#allocation3] sm:$0xf] 0.0
    $region21: #{tpu_custom_call.1} parent=1 // pred_fallthru
      _
    %v49 = vld [vmem:[#allocation4] sm:$0xf]
    %v50 = vld [vmem:[#allocation7] sm:$0xf]
    %v51 = vsub.f32 %v49, %v50
    %vm52 = vcmp.ne.f32.partialorder %v50, -1.0
    %v53 = vsel %vm52, %v51, 0.0
    %v54 = vld [vmem:[#allocation2] sm:$0xf]
    %v55 = vmul.f32 %v53, %v53
    %v56 = vadd.f32 %v54, %v55
    %57 = vst [vmem:[#allocation2] sm:$0xf] %v56
    %v58 = vld [vmem:[#allocation3] sm:$0xf]
    %v59 = vsel %vm52, 1, 0
    %v60 = vcvt.s32.f32 %v59
    %v61 = vadd.f32 %v58, %v60
    %62 = vst [vmem:[#allocation3] sm:$0xf] %v61
    // Predicated region
    $region22: #{tpu_custom_call.1} parent=1 // pred_check
      %p63 = pneg %p43
    $region23: #{tpu_custom_call.1} parent=1 // pred_check_branch
      %65 = sbr.rel (%p63) target = $region25
    $region24: #{tpu_custom_call.1} parent=1 // pred_region
      %v66 = vld [vmem:[#allocation2] sm:$0xf]
      %68 = vst [vmem:[#allocation1] ss:$4 sm:$0xff] %v66
      %v69 = vld.sshfl [vmem:[#allocation1] sm:$0xff pattern:$0x73625140]
      %v70 = vld.sshfl [vmem:[#allocation1 + $0x8] sm:$0xff pattern:$0x73625140]
      %vm73 = vcmask 1041408
      %v74 = vsel %vm73, %v69, 0.0
      %v75 = vsel %vm73, %v70, 0.0
      %v76 = vadd.f32 %v74, %v75
      %77 = vadd.xlane.f32.xlu0 %v76
      %v78 = vpop.xlane.xlu0 %77
      %v79 = vrot.slane %v78, 4
      %v80 = vadd.f32 %v78, %v79
      %v81 = vrot.slane %v80, 2
      %v82 = vadd.f32 %v80, %v81
      %v83 = vrot.slane %v82, 1
      %v84 = vadd.f32 %v82, %v83
      %s85 = vtos %v84
      %s86 = scalar_lea.smem [#allocation9], 0
      %87 = sst [smem:[%s86]] %s85
      %v88 = vld [vmem:[#allocation3] sm:$0xf]
      %90 = vst [vmem:[#allocation1] ss:$4 sm:$0xff] %v88
      %v91 = vld.sshfl [vmem:[#allocation1] sm:$0xff pattern:$0x73625140]
      %v92 = vld.sshfl [vmem:[#allocation1 + $0x8] sm:$0xff pattern:$0x73625140]
      %v95 = vsel %vm73, %v91, 0.0
      %v96 = vsel %vm73, %v92, 0.0
      %v97 = vadd.f32 %v95, %v96
      %98 = vadd.xlane.f32.xlu0 %v97
      %v99 = vpop.xlane.xlu0 %98
      %v100 = vrot.slane %v99, 4
      %v101 = vadd.f32 %v99, %v100
      %v102 = vrot.slane %v101, 2
      %v103 = vadd.f32 %v101, %v102
      %v104 = vrot.slane %v103, 1
      %v105 = vadd.f32 %v103, %v104
      %s106 = vtos %v105
      %s107 = scalar_lea.smem [#allocation10], 0
      %108 = sst [smem:[%s107]] %s106
    $region25: #{tpu_custom_call.1} parent=1 // pred_fallthru
      _
    // Predicated region
    $region26: #{tpu_custom_call.1} parent=1 // pred_check
      _
    $region27: #{tpu_custom_call.1} parent=1 // pred_check_branch
      %110 = sbr.rel (0) target = $region29
    $region28: #{tpu_custom_call.1} parent=1 // pred_region
      %112 = vsyncadd [#allocation6], 0
      %s114 = sshll.u32 %s2, 4
      %s115 = int_to_ptr.hbm [resolvable:$true] %s114
      %117 = dma.smem_to_hbm [#allocation9], 16, %s115, [#allocation6]
    $region29: #{tpu_custom_call.1} parent=1 // pred_fallthru
      _
    // Predicated region
    $region30: #{tpu_custom_call.1} parent=1 // pred_check
      _
    $region31: #{tpu_custom_call.1} parent=1 // pred_check_branch
      %119 = sbr.rel (0) target = $region33
    $region32: #{tpu_custom_call.1} parent=1 // pred_region
      %121 = vsyncadd [#allocation11], 0
      %s123 = sshll.u32 %s3, 4
      %s124 = int_to_ptr.hbm [resolvable:$true] %s123
      %126 = dma.smem_to_hbm [#allocation10], 16, %s124, [#allocation11]
    $region33: #{tpu_custom_call.1} parent=1 // pred_fallthru
      _
    // Predicated region
    $region34: #{tpu_custom_call.1} parent=1 // pred_check
      _
    $region35: #{tpu_custom_call.1} parent=1 // pred_check_branch
      %128 = sbr.rel (0) target = $region37
    $region36: #{tpu_custom_call.1} parent=1 // pred_region
      %130 = dma.done [#allocation6], 16
    $region37: #{tpu_custom_call.1} parent=1 // pred_fallthru
      _
    // Predicated region
    $region38: #{tpu_custom_call.1} parent=1 // pred_check
      _
    $region39: #{tpu_custom_call.1} parent=1 // pred_check_branch
      %132 = sbr.rel (0) target = $region41
    $region40: #{tpu_custom_call.1} parent=1 // pred_region
      %134 = dma.done [#allocation11], 16
    $region41: #{tpu_custom_call.1} parent=1 // pred_fallthru
      _
    %135 = sfence
    %136 = vsyncpa [#allocation5], 1
    %137 = vsyncpa [#allocation8], 1
    %138 = vsyncpa [#allocation6], 1
    %139 = vsyncpa [#allocation11], 1

</llo_original>
